<compile_context>
chip_gen: v7x
topology: tpu7x:2x2x1
jax: 0.10.0
libtpu: 0.0.40
codegen_flags: <defaults>
</compile_context>

<pallas_src>
import jax
import jax.numpy as jnp
from jax.experimental import pallas as pl
from jax.experimental.pallas import tpu as pltpu


def _sigmoid(x):
    # exp(-x) overflowing to +inf for very negative x still yields the correct 0.0 in f32.
    return 1.0 / (1.0 + jnp.exp(-x))


def _f32_dot_on_mxu(a, b):
    """(a @ b) for f32 operands with ~f32 accuracy on the bf16 MXU (hi/lo split, 3 passes)."""
    f32 = jnp.float32
    a_hi = a.astype(jnp.bfloat16)
    a_lo = (a - a_hi.astype(f32)).astype(jnp.bfloat16)
    b_hi = b.astype(jnp.bfloat16)
    b_lo = (b - b_hi.astype(f32)).astype(jnp.bfloat16)
    return (jnp.dot(a_hi, b_hi, preferred_element_type=f32)
            + jnp.dot(a_hi, b_lo, preferred_element_type=f32)
            + jnp.dot(a_lo, b_hi, preferred_element_type=f32))


def fused_model_kernel(x_ref, w1_ref, b1_ref, w2_ref, b2_ref, o_ref):
    """Single-block fused forward pass, channel-major / lane-dense.

    x_ref : (Cin, Mpad)  input pixels feeding conv1 (stride-2 / pad-2 already resolved:
                         column m is the pixel read by conv1 output m, zero where conv1
                         reads its zero padding -- silu(0) = 0 keeps that exact).
    w1_ref: (C1, Cin)    conv1 1x1 weight (PyTorch (out, in) layout).
    b1_ref: (C1, 1)      conv1 bias.
    w2_ref: (C2, C1)     conv2 1x1 weight.
    b2_ref: (C2, 1)      conv2 bias.
    o_ref : (C2, Mpad)   silu(conv2(...)) for every interior output pixel.
    """
    x = x_ref[...]
    s = x * _sigmoid(x)                                  # SiLU on the small (Cin, M) slab

    # conv1: K = 3 -> three lane-dense broadcast FMAs on the VPU (exact f32), rather than
    # pushing a K=3 contraction through the MXU.
    w1 = w1_ref[...]
    cin = x.shape[0]
    v2 = b1_ref[...] + sum(w1[:, c:c + 1] * s[c:c + 1, :] for c in range(cin))

    # v2 + v2*sigmoid(v2) == v2 * (1 + sigmoid(v2)): one fewer VPU multiply per element.
    v4 = v2 * (1.0 + _sigmoid(v2))                       # (C1, Mpad)

    # conv2: the real matmul (K=64) on the MXU, lane-dense output, fused SiLU epilogue.
    v5 = _f32_dot_on_mxu(w2_ref[...], v4) + b2_ref[...]
    o_ref[...] = v5 * _sigmoid(v5)


def model_forward(x_nchw, w1, b1, w2, b2):
    """NCHW forward of the module. w1:(64,3), b1:(64,), w2:(16,64), b2:(16,)."""
    n, cin, h, w = x_nchw.shape
    c1 = w1.shape[0]
    c2 = w2.shape[0]

    # conv1 geometry (kernel=1, stride=2, padding=2): output (i, j) reads input (2i-2, 2j-2).
    # The stride/pad sampling and NCHW<->channel-major relayout are thin XLA glue on a ~6 KB
    # tensor; all compute happens inside the single fused kernel below.
    oh1 = (h + 2 * 2 - 1) // 2 + 1
    ow1 = (w + 2 * 2 - 1) // 2 + 1
    nvh = (h + 1) // 2                       # in-bounds samples: rows 0, 2, 4, ...
    nvw = (w + 1) // 2
    core = x_nchw[:, :, ::2, ::2]            # (n, cin, nvh, nvw): the in-bounds reads
    xs = jnp.pad(core, ((0, 0), (0, 0),
                        (1, oh1 - 1 - nvh),  # output rows whose read lands in conv1's zero pad
                        (1, ow1 - 1 - nvw)))

    # Channel-major, lane-dense pixel axis (pad M up to a multiple of 128).
    m = n * oh1 * ow1
    mpad = max(128, pl.cdiv(m, 128) * 128)
    x_cm = jnp.pad(xs.transpose(1, 0, 2, 3).reshape(cin, m), ((0, 0), (0, mpad - m)))

    out_cm = pl.pallas_call(
        fused_model_kernel,
        out_shape=jax.ShapeDtypeStruct((c2, mpad), jnp.float32),
        in_specs=[pl.BlockSpec(memory_space=pltpu.MemorySpace.VMEM) for _ in range(5)],
        out_specs=pl.BlockSpec(memory_space=pltpu.MemorySpace.VMEM),
    )(x_cm, w1, b1.reshape(c1, 1), w2, b2.reshape(c2, 1))

    # conv2 geometry (kernel=1, stride=1, padding=1): interior output pixels are exactly
    # conv2 of the stage-1 map; the 1-pixel border only sees conv2's zero padding, i.e. the
    # per-channel constant silu(b2).
    interior = out_cm[:, :m].reshape(c2, n, oh1, ow1).transpose(1, 0, 2, 3)
    oh2, ow2 = oh1 + 2, ow1 + 2
    border = b2 * _sigmoid(b2)               # silu(b2), shape (c2,)
    out = jnp.broadcast_to(border[None, :, None, None], (n, c2, oh2, ow2))
    return out.at[:, :, 1:1 + oh1, 1:1 + ow1].set(interior)


def reference(x, w1, b1, w2, b2):
    """Ground truth at full f32 precision (HIGHEST avoids TPU bf16 matmul emulation noise)."""
    prec = jax.lax.Precision.HIGHEST
    silu = lambda t: t * jax.nn.sigmoid(t)
    v1 = silu(x)
    v2 = jax.lax.conv_general_dilated(
        v1, w1[:, :, None, None], window_strides=(2, 2), padding=((2, 2), (2, 2)),
        dimension_numbers=("NCHW", "OIHW", "NCHW"), precision=prec) + b1[None, :, None, None]
    v4 = v2 + silu(v2)
    v5 = jax.lax.conv_general_dilated(
        v4, w2[:, :, None, None], window_strides=(1, 1), padding=((1, 1), (1, 1)),
        dimension_numbers=("NCHW", "OIHW", "NCHW"), precision=prec) + b2[None, :, None, None]
    return silu(v5)


if __name__ == "__main__":
    key = jax.random.PRNGKey(0)
    kx, k1, k2, k3, k4 = jax.random.split(key, 5)

    # Small shapes consistent with the module: Conv2d(3, 64, 1, stride=2, padding=2) then
    # Conv2d(64, 16, 1, stride=1, padding=1); batch=2, 3 channels, 16x16 spatial.
    x = jax.random.normal(kx, (2, 3, 16, 16), dtype=jnp.float32)
    w1 = jax.random.normal(k1, (64, 3), dtype=jnp.float32) * 0.2    # PyTorch (out, in) layout
    b1 = jax.random.normal(k2, (64,), dtype=jnp.float32) * 0.1
    w2 = jax.random.normal(k3, (16, 64), dtype=jnp.float32) * 0.1
    b2 = jax.random.normal(k4, (16,), dtype=jnp.float32) * 0.1

    fwd = jax.jit(model_forward)
    out = jax.block_until_ready(fwd(x, w1, b1, w2, b2))
    ref = jax.block_until_ready(reference(x, w1, b1, w2, b2))

    assert out.shape == (2, 16, 12, 12), out.shape
    max_err = float(jnp.max(jnp.abs(out - ref)))
    assert jnp.allclose(out, ref, rtol=1e-4, atol=1e-4), max_err
    print("KERNEL_OK")
</pallas_src>

<mosaic_0001>
module attributes {stable_mosaic.version = 11 : i64} {
  func.func @fused_model_kernel(%arg0: memref<3x256xf32, #tpu.memory_space<vmem>>, %arg1: memref<64x3xf32, #tpu.memory_space<vmem>>, %arg2: memref<64x1xf32, #tpu.memory_space<vmem>>, %arg3: memref<16x64xf32, #tpu.memory_space<vmem>>, %arg4: memref<16x1xf32, #tpu.memory_space<vmem>>, %arg5: memref<16x256xf32, #tpu.memory_space<vmem>>) attributes {dimension_semantics = [], scalar_prefetch = 0 : i64, scratch_operands = 0 : i64, tpu.core_type = #tpu.core_type<tc>} {
    %c0 = arith.constant 0 : index
    %c0_0 = arith.constant 0 : index
    %0 = vector.load %arg0[%c0, %c0_0] : memref<3x256xf32, #tpu.memory_space<vmem>>, vector<3x256xf32>
    %cst = arith.constant 0.000000e+00 : f32
    %1 = vector.broadcast %cst : f32 to vector<3x256xf32>
    %2 = arith.subf %1, %0 : vector<3x256xf32>
    %3 = math.exp %2 : vector<3x256xf32>
    %cst_1 = arith.constant 1.000000e+00 : f32
    %4 = vector.broadcast %cst_1 : f32 to vector<3x256xf32>
    %5 = arith.addf %4, %3 : vector<3x256xf32>
    %cst_2 = arith.constant 1.000000e+00 : f32
    %6 = vector.broadcast %cst_2 : f32 to vector<3x256xf32>
    %7 = arith.divf %6, %5 : vector<3x256xf32>
    %8 = arith.mulf %0, %7 : vector<3x256xf32>
    %c0_3 = arith.constant 0 : index
    %c0_4 = arith.constant 0 : index
    %9 = vector.load %arg1[%c0_3, %c0_4] : memref<64x3xf32, #tpu.memory_space<vmem>>, vector<64x3xf32>
    %c0_5 = arith.constant 0 : index
    %c0_6 = arith.constant 0 : index
    %10 = vector.load %arg2[%c0_5, %c0_6] : memref<64x1xf32, #tpu.memory_space<vmem>>, vector<64x1xf32>
    %11 = vector.extract_strided_slice %9 {offsets = [0, 0], sizes = [64, 1], strides = [1, 1]} : vector<64x3xf32> to vector<64x1xf32>
    %12 = vector.extract_strided_slice %8 {offsets = [0, 0], sizes = [1, 256], strides = [1, 1]} : vector<3x256xf32> to vector<1x256xf32>
    %13 = vector.broadcast %11 : vector<64x1xf32> to vector<64x256xf32>
    %14 = vector.broadcast %12 : vector<1x256xf32> to vector<64x256xf32>
    %15 = arith.mulf %13, %14 : vector<64x256xf32>
    %cst_7 = arith.constant 0.000000e+00 : f32
    %16 = vector.broadcast %cst_7 : f32 to vector<64x256xf32>
    %17 = arith.addf %16, %15 : vector<64x256xf32>
    %18 = vector.extract_strided_slice %9 {offsets = [0, 1], sizes = [64, 1], strides = [1, 1]} : vector<64x3xf32> to vector<64x1xf32>
    %19 = vector.extract_strided_slice %8 {offsets = [1, 0], sizes = [1, 256], strides = [1, 1]} : vector<3x256xf32> to vector<1x256xf32>
    %20 = vector.broadcast %18 : vector<64x1xf32> to vector<64x256xf32>
    %21 = vector.broadcast %19 : vector<1x256xf32> to vector<64x256xf32>
    %22 = arith.mulf %20, %21 : vector<64x256xf32>
    %23 = arith.addf %17, %22 : vector<64x256xf32>
    %24 = vector.extract_strided_slice %9 {offsets = [0, 2], sizes = [64, 1], strides = [1, 1]} : vector<64x3xf32> to vector<64x1xf32>
    %25 = vector.extract_strided_slice %8 {offsets = [2, 0], sizes = [1, 256], strides = [1, 1]} : vector<3x256xf32> to vector<1x256xf32>
    %26 = vector.broadcast %24 : vector<64x1xf32> to vector<64x256xf32>
    %27 = vector.broadcast %25 : vector<1x256xf32> to vector<64x256xf32>
    %28 = arith.mulf %26, %27 : vector<64x256xf32>
    %29 = arith.addf %23, %28 : vector<64x256xf32>
    %30 = vector.broadcast %10 : vector<64x1xf32> to vector<64x256xf32>
    %31 = arith.addf %30, %29 : vector<64x256xf32>
    %cst_8 = arith.constant 0.000000e+00 : f32
    %32 = vector.broadcast %cst_8 : f32 to vector<64x256xf32>
    %33 = arith.subf %32, %31 : vector<64x256xf32>
    %34 = math.exp %33 : vector<64x256xf32>
    %cst_9 = arith.constant 1.000000e+00 : f32
    %35 = vector.broadcast %cst_9 : f32 to vector<64x256xf32>
    %36 = arith.addf %35, %34 : vector<64x256xf32>
    %cst_10 = arith.constant 1.000000e+00 : f32
    %37 = vector.broadcast %cst_10 : f32 to vector<64x256xf32>
    %38 = arith.divf %37, %36 : vector<64x256xf32>
    %cst_11 = arith.constant 1.000000e+00 : f32
    %39 = vector.broadcast %cst_11 : f32 to vector<64x256xf32>
    %40 = arith.addf %39, %38 : vector<64x256xf32>
    %41 = arith.mulf %31, %40 : vector<64x256xf32>
    %c0_12 = arith.constant 0 : index
    %c0_13 = arith.constant 0 : index
    %42 = vector.load %arg3[%c0_12, %c0_13] : memref<16x64xf32, #tpu.memory_space<vmem>>, vector<16x64xf32>
    %43 = arith.truncf %42 : vector<16x64xf32> to vector<16x64xbf16>
    %44 = arith.extf %43 : vector<16x64xbf16> to vector<16x64xf32>
    %45 = arith.subf %42, %44 : vector<16x64xf32>
    %46 = arith.truncf %45 : vector<16x64xf32> to vector<16x64xbf16>
    %47 = arith.truncf %41 : vector<64x256xf32> to vector<64x256xbf16>
    %48 = arith.extf %47 : vector<64x256xbf16> to vector<64x256xf32>
    %49 = arith.subf %41, %48 : vector<64x256xf32>
    %50 = arith.truncf %49 : vector<64x256xf32> to vector<64x256xbf16>
    %cst_14 = arith.constant dense<0.000000e+00> : vector<16x256xf32>
    %51 = tpu.matmul %43, %47, %cst_14 {dimension_numbers = #tpu.dot_dimension_numbers<[1], [0], [0], [1], [0, 0, 1, 1], [], []>} : vector<16x64xbf16>, vector<64x256xbf16>, vector<16x256xf32> -> vector<16x256xf32>
    %cst_15 = arith.constant dense<0.000000e+00> : vector<16x256xf32>
    %52 = tpu.matmul %43, %50, %cst_15 {dimension_numbers = #tpu.dot_dimension_numbers<[1], [0], [0], [1], [0, 0, 1, 1], [], []>} : vector<16x64xbf16>, vector<64x256xbf16>, vector<16x256xf32> -> vector<16x256xf32>
    %53 = arith.addf %51, %52 : vector<16x256xf32>
    %cst_16 = arith.constant dense<0.000000e+00> : vector<16x256xf32>
    %54 = tpu.matmul %46, %47, %cst_16 {dimension_numbers = #tpu.dot_dimension_numbers<[1], [0], [0], [1], [0, 0, 1, 1], [], []>} : vector<16x64xbf16>, vector<64x256xbf16>, vector<16x256xf32> -> vector<16x256xf32>
    %55 = arith.addf %53, %54 : vector<16x256xf32>
    %c0_17 = arith.constant 0 : index
    %c0_18 = arith.constant 0 : index
    %56 = vector.load %arg4[%c0_17, %c0_18] : memref<16x1xf32, #tpu.memory_space<vmem>>, vector<16x1xf32>
    %57 = vector.broadcast %56 : vector<16x1xf32> to vector<16x256xf32>
    %58 = arith.addf %55, %57 : vector<16x256xf32>
    %cst_19 = arith.constant 0.000000e+00 : f32
    %59 = vector.broadcast %cst_19 : f32 to vector<16x256xf32>
    %60 = arith.subf %59, %58 : vector<16x256xf32>
    %61 = math.exp %60 : vector<16x256xf32>
    %cst_20 = arith.constant 1.000000e+00 : f32
    %62 = vector.broadcast %cst_20 : f32 to vector<16x256xf32>
    %63 = arith.addf %62, %61 : vector<16x256xf32>
    %cst_21 = arith.constant 1.000000e+00 : f32
    %64 = vector.broadcast %cst_21 : f32 to vector<16x256xf32>
    %65 = arith.divf %64, %63 : vector<16x256xf32>
    %66 = arith.mulf %58, %65 : vector<16x256xf32>
    %c0_22 = arith.constant 0 : index
    %c0_23 = arith.constant 0 : index
    %67 = vector.load %arg5[%c0_22, %c0_23] : memref<16x256xf32, #tpu.memory_space<vmem>>, vector<16x256xf32>
    tpu.vector_store %arg5[%c0_22, %c0_23], %66 {strides = array<i32>} : memref<16x256xf32, #tpu.memory_space<vmem>>, vector<16x256xf32>,
    return
  }
}

</mosaic_0001>

<llo_original>
// kernel: model_forward.1
$region0: #{model_forward.1}
  #allocation0 [shape = 'u32[]', space=smem, size = 0x4, offset = 0x4, fixed_abs, tag = 'smem constant byte address 0x4 - core index']
  #allocation1 [shape = 'u32[144,128]{1,0:T(1,128)}', space=vmem, size = 0x12000, scoped, tag = 'internal scratch']
  %s0 = inlined_call_operand.vmem [shape: f32[3,256], index: 0, kind: input, shape index: {}]
  %s1 = inlined_call_operand.vmem [shape: f32[64,3], index: 1, kind: input, shape index: {}]
  %s2 = inlined_call_operand.vmem [shape: f32[64,1], index: 2, kind: input, shape index: {}]
  %s3 = inlined_call_operand.vmem [shape: f32[16,64], index: 3, kind: input, shape index: {}]
  %s4 = inlined_call_operand.vmem [shape: f32[16,1], index: 4, kind: input, shape index: {}]
  %s5 = inlined_call_operand.vmem [shape: f32[16,256], index: 5, kind: output, shape index: {}]
  %s6 = sld [smem:[#allocation0]]
  $region30: #{model_forward.1} parent=0
    _
  %s8 = ssub.s32 1, %s6
  %s9 = scalar_select 0, %s8, %s6
  // Predicated region
  $region2: #{model_forward.1} parent=0 // pred_check
    _
  $region3: #{model_forward.1} parent=0 // pred_check_branch
    %11 = sbr.rel (0) target = $region5
  $region4: #{model_forward.1} parent=0 // pred_region
    _
  $region5: #{model_forward.1} parent=0 // pred_fallthru
    _
  // Predicated region
  $region6: #{model_forward.1} parent=0 // pred_check
    _
  $region7: #{model_forward.1} parent=0 // pred_check_branch
    %13 = sbr.rel (0) target = $region9
  $region8: #{model_forward.1} parent=0 // pred_region
    _
  $region9: #{model_forward.1} parent=0 // pred_fallthru
    _
  // Predicated region
  $region10: #{model_forward.1} parent=0 // pred_check
    _
  $region11: #{model_forward.1} parent=0 // pred_check_branch
    %15 = sbr.rel (0) target = $region13
  $region12: #{model_forward.1} parent=0 // pred_region
    _
  $region13: #{model_forward.1} parent=0 // pred_fallthru
    _
  // Predicated region
  $region14: #{model_forward.1} parent=0 // pred_check
    _
  $region15: #{model_forward.1} parent=0 // pred_check_branch
    %17 = sbr.rel (0) target = $region17
  $region16: #{model_forward.1} parent=0 // pred_region
    _
  $region17: #{model_forward.1} parent=0 // pred_fallthru
    _
  // Predicated region
  $region18: #{model_forward.1} parent=0 // pred_check
    _
  $region19: #{model_forward.1} parent=0 // pred_check_branch
    %19 = sbr.rel (0) target = $region21
  $region20: #{model_forward.1} parent=0 // pred_region
    _
  $region21: #{model_forward.1} parent=0 // pred_fallthru
    _
  %v21 = vld [vmem:[%s0] sm:$0x77]
  %v22 = vsub.f32 0.0, %v21
  %v23 = vmul.f32 %v22, 1.442695
  %v24 = vpow.pop %v23
  %v25 = vadd.f32 %v24, 1.0
  %v26 = vrcp.pop %v25
  %v27 = vmul.f32 1.0, %v26
  %v28 = vmul.f32 %v21, %v27
  %v29 = vld [vmem:[%s1] sm:$0xff]
  %v30 = vld [vmem:[%s1 + $0x8] sm:$0xff]
  %v31 = vld [vmem:[%s1 + $0x10] sm:$0xff]
  %v32 = vld [vmem:[%s1 + $0x18] sm:$0xff]
  %v33 = vld [vmem:[%s1 + $0x20] sm:$0xff]
  %v34 = vld [vmem:[%s1 + $0x28] sm:$0xff]
  %v35 = vld [vmem:[%s1 + $0x30] sm:$0xff]
  %v36 = vld [vmem:[%s1 + $0x38] sm:$0xff]
  %v37 = vld [vmem:[%s2] sm:$0xff]
  %v38 = vld [vmem:[%s2 + $0x8] sm:$0xff]
  %v39 = vld [vmem:[%s2 + $0x10] sm:$0xff]
  %v40 = vld [vmem:[%s2 + $0x18] sm:$0xff]
  %v41 = vld [vmem:[%s2 + $0x20] sm:$0xff]
  %v42 = vld [vmem:[%s2 + $0x28] sm:$0xff]
  %v43 = vld [vmem:[%s2 + $0x30] sm:$0xff]
  %v44 = vld [vmem:[%s2 + $0x38] sm:$0xff]
  %46 = vset.pattern.permute.xlu0 0
  %47 = vperm.xlu0 %46, %v29
  %v48 = vpop.permute.xlu0 %47
  %51 = vset.pattern.permute.xlu0 0
  %52 = vperm.xlu0 %51, %v30
  %v53 = vpop.permute.xlu0 %52
  %56 = vset.pattern.permute.xlu0 0
  %57 = vperm.xlu0 %56, %v31
  %v58 = vpop.permute.xlu0 %57
  %61 = vset.pattern.permute.xlu0 0
  %62 = vperm.xlu0 %61, %v32
  %v63 = vpop.permute.xlu0 %62
  %66 = vset.pattern.permute.xlu0 0
  %67 = vperm.xlu0 %66, %v33
  %v68 = vpop.permute.xlu0 %67
  %71 = vset.pattern.permute.xlu0 0
  %72 = vperm.xlu0 %71, %v34
  %v73 = vpop.permute.xlu0 %72
  %76 = vset.pattern.permute.xlu0 0
  %77 = vperm.xlu0 %76, %v35
  %v78 = vpop.permute.xlu0 %77
  %81 = vset.pattern.permute.xlu0 0
  %82 = vperm.xlu0 %81, %v36
  %v83 = vpop.permute.xlu0 %82
  %v86 = vlaneseq
  %v87 = vshrl.u32 %v86, 7
  %v88 = vsub.s32 0, %v87
  %v89 = vrot.slane %v28, %v88
  %v90 = vlaneseq
  %v91 = vshrl.u32 %v90, 7
  %v92 = vsub.s32 4, %v91
  %v93 = vrot.slane %v28, %v92
  %v96 = vlaneseq
  %v97 = vshrl.u32 %v96, 7
  %v98 = vsub.s32 0, %v97
  %v99 = vrot.slane %v89, %v98
  %v100 = vlaneseq
  %v101 = vshrl.u32 %v100, 7
  %v102 = vsub.s32 0, %v101
  %v103 = vrot.slane %v93, %v102
  %v104 = vmul.f32 %v48, %v99
  %v105 = vmul.f32 %v48, %v103
  %v106 = vmul.f32 %v53, %v99
  %v107 = vmul.f32 %v53, %v103
  %v108 = vmul.f32 %v58, %v99
  %v109 = vmul.f32 %v58, %v103
  %v110 = vmul.f32 %v63, %v99
  %v111 = vmul.f32 %v63, %v103
  %v112 = vmul.f32 %v68, %v99
  %v113 = vmul.f32 %v68, %v103
  %v114 = vmul.f32 %v73, %v99
  %v115 = vmul.f32 %v73, %v103
  %v116 = vmul.f32 %v78, %v99
  %v117 = vmul.f32 %v78, %v103
  %v118 = vmul.f32 %v83, %v99
  %v119 = vmul.f32 %v83, %v103
  %v120 = vadd.f32 %v104, 0.0
  %v121 = vadd.f32 %v105, 0.0
  %v122 = vadd.f32 %v106, 0.0
  %v123 = vadd.f32 %v107, 0.0
  %v124 = vadd.f32 %v108, 0.0
  %v125 = vadd.f32 %v109, 0.0
  %v126 = vadd.f32 %v110, 0.0
  %v127 = vadd.f32 %v111, 0.0
  %v128 = vadd.f32 %v112, 0.0
  %v129 = vadd.f32 %v113, 0.0
  %v130 = vadd.f32 %v114, 0.0
  %v131 = vadd.f32 %v115, 0.0
  %v132 = vadd.f32 %v116, 0.0
  %v133 = vadd.f32 %v117, 0.0
  %v134 = vadd.f32 %v118, 0.0
  %v135 = vadd.f32 %v119, 0.0
  %136 = vset.pattern.permute.xlu0 1
  %137 = vperm.xlu0 %136, %v29
  %v138 = vpop.permute.xlu0 %137
  %140 = vset.pattern.permute.xlu0 1
  %141 = vperm.xlu0 %140, %v30
  %v142 = vpop.permute.xlu0 %141
  %144 = vset.pattern.permute.xlu0 1
  %145 = vperm.xlu0 %144, %v31
  %v146 = vpop.permute.xlu0 %145
  %148 = vset.pattern.permute.xlu0 1
  %149 = vperm.xlu0 %148, %v32
  %v150 = vpop.permute.xlu0 %149
  %152 = vset.pattern.permute.xlu0 1
  %153 = vperm.xlu0 %152, %v33
  %v154 = vpop.permute.xlu0 %153
  %156 = vset.pattern.permute.xlu0 1
  %157 = vperm.xlu0 %156, %v34
  %v158 = vpop.permute.xlu0 %157
  %160 = vset.pattern.permute.xlu0 1
  %161 = vperm.xlu0 %160, %v35
  %v162 = vpop.permute.xlu0 %161
  %164 = vset.pattern.permute.xlu0 1
  %165 = vperm.xlu0 %164, %v36
  %v166 = vpop.permute.xlu0 %165
  %v168 = vlaneseq
  %v169 = vshrl.u32 %v168, 7
  %v170 = vsub.s32 1, %v169
  %v171 = vrot.slane %v28, %v170
  %v172 = vlaneseq
  %v173 = vshrl.u32 %v172, 7
  %v174 = vsub.s32 5, %v173
  %v175 = vrot.slane %v28, %v174
  %v178 = vlaneseq
  %v179 = vshrl.u32 %v178, 7
  %v180 = vsub.s32 1, %v179
  %v181 = vrot.slane %v171, %v180
  %v182 = vlaneseq
  %v183 = vshrl.u32 %v182, 7
  %v184 = vsub.s32 1, %v183
  %v185 = vrot.slane %v175, %v184
  %v186 = vmul.f32 %v138, %v181
  %v187 = vmul.f32 %v138, %v185
  %v188 = vmul.f32 %v142, %v181
  %v189 = vmul.f32 %v142, %v185
  %v190 = vmul.f32 %v146, %v181
  %v191 = vmul.f32 %v146, %v185
  %v192 = vmul.f32 %v150, %v181
  %v193 = vmul.f32 %v150, %v185
  %v194 = vmul.f32 %v154, %v181
  %v195 = vmul.f32 %v154, %v185
  %v196 = vmul.f32 %v158, %v181
  %v197 = vmul.f32 %v158, %v185
  %v198 = vmul.f32 %v162, %v181
  %v199 = vmul.f32 %v162, %v185
  %v200 = vmul.f32 %v166, %v181
  %v201 = vmul.f32 %v166, %v185
  %v202 = vadd.f32 %v120, %v186
  %v203 = vadd.f32 %v121, %v187
  %v204 = vadd.f32 %v122, %v188
  %v205 = vadd.f32 %v123, %v189
  %v206 = vadd.f32 %v124, %v190
  %v207 = vadd.f32 %v125, %v191
  %v208 = vadd.f32 %v126, %v192
  %v209 = vadd.f32 %v127, %v193
  %v210 = vadd.f32 %v128, %v194
  %v211 = vadd.f32 %v129, %v195
  %v212 = vadd.f32 %v130, %v196
  %v213 = vadd.f32 %v131, %v197
  %v214 = vadd.f32 %v132, %v198
  %v215 = vadd.f32 %v133, %v199
  %v216 = vadd.f32 %v134, %v200
  %v217 = vadd.f32 %v135, %v201
  %218 = vset.pattern.permute.xlu0 2
  %219 = vperm.xlu0 %218, %v29
  %v220 = vpop.permute.xlu0 %219
  %222 = vset.pattern.permute.xlu0 2
  %223 = vperm.xlu0 %222, %v30
  %v224 = vpop.permute.xlu0 %223
  %226 = vset.pattern.permute.xlu0 2
  %227 = vperm.xlu0 %226, %v31
  %v228 = vpop.permute.xlu0 %227
  %230 = vset.pattern.permute.xlu0 2
  %231 = vperm.xlu0 %230, %v32
  %v232 = vpop.permute.xlu0 %231
  %234 = vset.pattern.permute.xlu0 2
  %235 = vperm.xlu0 %234, %v33
  %v236 = vpop.permute.xlu0 %235
  %238 = vset.pattern.permute.xlu0 2
  %239 = vperm.xlu0 %238, %v34
  %v240 = vpop.permute.xlu0 %239
  %242 = vset.pattern.permute.xlu0 2
  %243 = vperm.xlu0 %242, %v35
  %v244 = vpop.permute.xlu0 %243
  %246 = vset.pattern.permute.xlu0 2
  %247 = vperm.xlu0 %246, %v36
  %v248 = vpop.permute.xlu0 %247
  %v250 = vlaneseq
  %v251 = vshrl.u32 %v250, 7
  %v252 = vsub.s32 2, %v251
  %v253 = vrot.slane %v28, %v252
  %v254 = vlaneseq
  %v255 = vshrl.u32 %v254, 7
  %v256 = vsub.s32 6, %v255
  %v257 = vrot.slane %v28, %v256
  %v260 = vlaneseq
  %v261 = vshrl.u32 %v260, 7
  %v262 = vsub.s32 2, %v261
  %v263 = vrot.slane %v253, %v262
  %v264 = vlaneseq
  %v265 = vshrl.u32 %v264, 7
  %v266 = vsub.s32 2, %v265
  %v267 = vrot.slane %v257, %v266
  %v268 = vmul.f32 %v220, %v263
  %v269 = vmul.f32 %v220, %v267
  %v270 = vmul.f32 %v224, %v263
  %v271 = vmul.f32 %v224, %v267
  %v272 = vmul.f32 %v228, %v263
  %v273 = vmul.f32 %v228, %v267
  %v274 = vmul.f32 %v232, %v263
  %v275 = vmul.f32 %v232, %v267
  %v276 = vmul.f32 %v236, %v263
  %v277 = vmul.f32 %v236, %v267
  %v278 = vmul.f32 %v240, %v263
  %v279 = vmul.f32 %v240, %v267
  %v280 = vmul.f32 %v244, %v263
  %v281 = vmul.f32 %v244, %v267
  %v282 = vmul.f32 %v248, %v263
  %v283 = vmul.f32 %v248, %v267
  %v284 = vadd.f32 %v202, %v268
  %v285 = vadd.f32 %v203, %v269
  %v286 = vadd.f32 %v204, %v270
  %v287 = vadd.f32 %v205, %v271
  %v288 = vadd.f32 %v206, %v272
  %v289 = vadd.f32 %v207, %v273
  %v290 = vadd.f32 %v208, %v274
  %v291 = vadd.f32 %v209, %v275
  %v292 = vadd.f32 %v210, %v276
  %v293 = vadd.f32 %v211, %v277
  %v294 = vadd.f32 %v212, %v278
  %v295 = vadd.f32 %v213, %v279
  %v296 = vadd.f32 %v214, %v280
  %v297 = vadd.f32 %v215, %v281
  %v298 = vadd.f32 %v216, %v282
  %v299 = vadd.f32 %v217, %v283
  %301 = vset.pattern.permute.xlu0 0
  %302 = vperm.xlu0 %301, %v37
  %v303 = vpop.permute.xlu0 %302
  %306 = vset.pattern.permute.xlu0 0
  %307 = vperm.xlu0 %306, %v38
  %v308 = vpop.permute.xlu0 %307
  %311 = vset.pattern.permute.xlu0 0
  %312 = vperm.xlu0 %311, %v39
  %v313 = vpop.permute.xlu0 %312
  %316 = vset.pattern.permute.xlu0 0
  %317 = vperm.xlu0 %316, %v40
  %v318 = vpop.permute.xlu0 %317
  %321 = vset.pattern.permute.xlu0 0
  %322 = vperm.xlu0 %321, %v41
  %v323 = vpop.permute.xlu0 %322
  %326 = vset.pattern.permute.xlu0 0
  %327 = vperm.xlu0 %326, %v42
  %v328 = vpop.permute.xlu0 %327
  %331 = vset.pattern.permute.xlu0 0
  %332 = vperm.xlu0 %331, %v43
  %v333 = vpop.permute.xlu0 %332
  %336 = vset.pattern.permute.xlu0 0
  %337 = vperm.xlu0 %336, %v44
  %v338 = vpop.permute.xlu0 %337
  %v340 = vadd.f32 %v303, %v284
  %v341 = vadd.f32 %v303, %v285
  %v342 = vadd.f32 %v308, %v286
  %v343 = vadd.f32 %v308, %v287
  %v344 = vadd.f32 %v313, %v288
  %v345 = vadd.f32 %v313, %v289
  %v346 = vadd.f32 %v318, %v290
  %v347 = vadd.f32 %v318, %v291
  %v348 = vadd.f32 %v323, %v292
  %v349 = vadd.f32 %v323, %v293
  %v350 = vadd.f32 %v328, %v294
  %v351 = vadd.f32 %v328, %v295
  %v352 = vadd.f32 %v333, %v296
  %v353 = vadd.f32 %v333, %v297
  %v354 = vadd.f32 %v338, %v298
  %v355 = vadd.f32 %v338, %v299
  %v356 = vsub.f32 0.0, %v340
  %v357 = vsub.f32 0.0, %v341
  %v358 = vsub.f32 0.0, %v342
  %v359 = vsub.f32 0.0, %v343
  %v360 = vsub.f32 0.0, %v344
  %v361 = vsub.f32 0.0, %v345
  %v362 = vsub.f32 0.0, %v346
  %v363 = vsub.f32 0.0, %v347
  %v364 = vsub.f32 0.0, %v348
  %v365 = vsub.f32 0.0, %v349
  %v366 = vsub.f32 0.0, %v350
  %v367 = vsub.f32 0.0, %v351
  %v368 = vsub.f32 0.0, %v352
  %v369 = vsub.f32 0.0, %v353
  %v370 = vsub.f32 0.0, %v354
  %v371 = vsub.f32 0.0, %v355
  %v372 = vmul.f32 %v356, 1.442695
  %v373 = vpow.pop %v372
  %v374 = vmul.f32 %v357, 1.442695
  %v375 = vpow.pop %v374
  %v376 = vmul.f32 %v358, 1.442695
  %v377 = vpow.pop %v376
  %v378 = vmul.f32 %v359, 1.442695
  %v379 = vpow.pop %v378
  %v380 = vmul.f32 %v360, 1.442695
  %v381 = vpow.pop %v380
  %v382 = vmul.f32 %v361, 1.442695
  %v383 = vpow.pop %v382
  %v384 = vmul.f32 %v362, 1.442695
  %v385 = vpow.pop %v384
  %v386 = vmul.f32 %v363, 1.442695
  %v387 = vpow.pop %v386
  %v388 = vmul.f32 %v364, 1.442695
  %v389 = vpow.pop %v388
  %v390 = vmul.f32 %v365, 1.442695
  %v391 = vpow.pop %v390
  %v392 = vmul.f32 %v366, 1.442695
  %v393 = vpow.pop %v392
  %v394 = vmul.f32 %v367, 1.442695
  %v395 = vpow.pop %v394
  %v396 = vmul.f32 %v368, 1.442695
  %v397 = vpow.pop %v396
  %v398 = vmul.f32 %v369, 1.442695
  %v399 = vpow.pop %v398
  %v400 = vmul.f32 %v370, 1.442695
  %v401 = vpow.pop %v400
  %v402 = vmul.f32 %v371, 1.442695
  %v403 = vpow.pop %v402
  %v404 = vadd.f32 %v373, 1.0
  %v405 = vadd.f32 %v375, 1.0
  %v406 = vadd.f32 %v377, 1.0
  %v407 = vadd.f32 %v379, 1.0
  %v408 = vadd.f32 %v381, 1.0
  %v409 = vadd.f32 %v383, 1.0
  %v410 = vadd.f32 %v385, 1.0
  %v411 = vadd.f32 %v387, 1.0
  %v412 = vadd.f32 %v389, 1.0
  %v413 = vadd.f32 %v391, 1.0
  %v414 = vadd.f32 %v393, 1.0
  %v415 = vadd.f32 %v395, 1.0
  %v416 = vadd.f32 %v397, 1.0
  %v417 = vadd.f32 %v399, 1.0
  %v418 = vadd.f32 %v401, 1.0
  %v419 = vadd.f32 %v403, 1.0
  %v420 = vrcp.pop %v404
  %v421 = vmul.f32 1.0, %v420
  %v422 = vrcp.pop %v405
  %v423 = vmul.f32 1.0, %v422
  %v424 = vrcp.pop %v406
  %v425 = vmul.f32 1.0, %v424
  %v426 = vrcp.pop %v407
  %v427 = vmul.f32 1.0, %v426
  %v428 = vrcp.pop %v408
  %v429 = vmul.f32 1.0, %v428
  %v430 = vrcp.pop %v409
  %v431 = vmul.f32 1.0, %v430
  %v432 = vrcp.pop %v410
  %v433 = vmul.f32 1.0, %v432
  %v434 = vrcp.pop %v411
  %v435 = vmul.f32 1.0, %v434
  %v436 = vrcp.pop %v412
  %v437 = vmul.f32 1.0, %v436
  %v438 = vrcp.pop %v413
  %v439 = vmul.f32 1.0, %v438
  %v440 = vrcp.pop %v414
  %v441 = vmul.f32 1.0, %v440
  %v442 = vrcp.pop %v415
  %v443 = vmul.f32 1.0, %v442
  %v444 = vrcp.pop %v416
  %v445 = vmul.f32 1.0, %v444
  %v446 = vrcp.pop %v417
  %v447 = vmul.f32 1.0, %v446
  %v448 = vrcp.pop %v418
  %v449 = vmul.f32 1.0, %v448
  %v450 = vrcp.pop %v419
  %v451 = vmul.f32 1.0, %v450
  %v452 = vadd.f32 %v421, 1.0
  %v453 = vadd.f32 %v423, 1.0
  %v454 = vadd.f32 %v425, 1.0
  %v455 = vadd.f32 %v427, 1.0
  %v456 = vadd.f32 %v429, 1.0
  %v457 = vadd.f32 %v431, 1.0
  %v458 = vadd.f32 %v433, 1.0
  %v459 = vadd.f32 %v435, 1.0
  %v460 = vadd.f32 %v437, 1.0
  %v461 = vadd.f32 %v439, 1.0
  %v462 = vadd.f32 %v441, 1.0
  %v463 = vadd.f32 %v443, 1.0
  %v464 = vadd.f32 %v445, 1.0
  %v465 = vadd.f32 %v447, 1.0
  %v466 = vadd.f32 %v449, 1.0
  %v467 = vadd.f32 %v451, 1.0
  %v468 = vmul.f32 %v340, %v452
  %v469 = vmul.f32 %v341, %v453
  %v470 = vmul.f32 %v342, %v454
  %v471 = vmul.f32 %v343, %v455
  %v472 = vmul.f32 %v344, %v456
  %v473 = vmul.f32 %v345, %v457
  %v474 = vmul.f32 %v346, %v458
  %v475 = vmul.f32 %v347, %v459
  %v476 = vmul.f32 %v348, %v460
  %v477 = vmul.f32 %v349, %v461
  %v478 = vmul.f32 %v350, %v462
  %v479 = vmul.f32 %v351, %v463
  %v480 = vmul.f32 %v352, %v464
  %v481 = vmul.f32 %v353, %v465
  %v482 = vmul.f32 %v354, %v466
  %v483 = vmul.f32 %v355, %v467
  %v484 = vld [vmem:[%s3] sm:$0xff]
  %v485 = vld [vmem:[%s3 + $0x8] sm:$0xff]
  %v486 = vpack.c.bf16 %v485, %v484
  %v487 = vunpack.c.l.bf16 %v486
  %v488 = vunpack.c.h.bf16 %v486
  %v489 = vsub.f32 %v484, %v487
  %v490 = vsub.f32 %v485, %v488
  %v491 = vpack.c.bf16 %v490, %v489
  %v492 = vpack.c.bf16 %v470, %v468
  %v493 = vpack.c.bf16 %v471, %v469
  %v494 = vpack.c.bf16 %v474, %v472
  %v495 = vpack.c.bf16 %v475, %v473
  %v496 = vpack.c.bf16 %v478, %v476
  %v497 = vpack.c.bf16 %v479, %v477
  %v498 = vpack.c.bf16 %v482, %v480
  %v499 = vpack.c.bf16 %v483, %v481
  %v500 = vunpack.c.l.bf16 %v492
  %v501 = vunpack.c.l.bf16 %v493
  %v502 = vunpack.c.h.bf16 %v492
  %v503 = vunpack.c.h.bf16 %v493
  %v504 = vunpack.c.l.bf16 %v494
  %v505 = vunpack.c.l.bf16 %v495
  %v506 = vunpack.c.h.bf16 %v494
  %v507 = vunpack.c.h.bf16 %v495
  %v508 = vunpack.c.l.bf16 %v496
  %v509 = vunpack.c.l.bf16 %v497
  %v510 = vunpack.c.h.bf16 %v496
  %v511 = vunpack.c.h.bf16 %v497
  %v512 = vunpack.c.l.bf16 %v498
  %v513 = vunpack.c.l.bf16 %v499
  %v514 = vunpack.c.h.bf16 %v498
  %v515 = vunpack.c.h.bf16 %v499
  %v516 = vsub.f32 %v468, %v500
  %v517 = vsub.f32 %v469, %v501
  %v518 = vsub.f32 %v470, %v502
  %v519 = vsub.f32 %v471, %v503
  %v520 = vsub.f32 %v472, %v504
  %v521 = vsub.f32 %v473, %v505
  %v522 = vsub.f32 %v474, %v506
  %v523 = vsub.f32 %v475, %v507
  %v524 = vsub.f32 %v476, %v508
  %v525 = vsub.f32 %v477, %v509
  %v526 = vsub.f32 %v478, %v510
  %v527 = vsub.f32 %v479, %v511
  %v528 = vsub.f32 %v480, %v512
  %v529 = vsub.f32 %v481, %v513
  %v530 = vsub.f32 %v482, %v514
  %v531 = vsub.f32 %v483, %v515
  %v532 = vpack.c.bf16 %v518, %v516
  %v533 = vpack.c.bf16 %v519, %v517
  %v534 = vpack.c.bf16 %v522, %v520
  %v535 = vpack.c.bf16 %v523, %v521
  %v536 = vpack.c.bf16 %v526, %v524
  %v537 = vpack.c.bf16 %v527, %v525
  %v538 = vpack.c.bf16 %v530, %v528
  %v539 = vpack.c.bf16 %v531, %v529
  %vm540 = vcmask 523264
  %v542 = vsel %vm540, %v486, 0
  %544 = vmatprep.subr.bf16.mxu0 %v533
  %545 = vmatpush1.bf16.msra.mxu0 %v532
  %546 = vmatprep.subr.bf16.mxu0 %v535
  %547 = vmatpush1.bf16.msra.mxu0 %v534
  %548 = vmatprep.subr.bf16.mxu0 %v537
  %549 = vmatpush1.bf16.msra.mxu0 %v536
  %550 = vmatprep.subr.bf16.mxu0 %v539
  %551 = vmatpush1.bf16.msra.mxu0 %v538
  %552 = vmatprep.subr.bf16.mxu0 0
  %553 = vmatpush1.bf16.msra.mxu0 0
  %554 = vmatprep.subr.bf16.mxu0 0
  %555 = vmatpush1.bf16.msra.mxu0 0
  %556 = vmatprep.subr.bf16.mxu0 0
  %557 = vmatpush1.bf16.msra.mxu0 0
  %558 = vmatprep.subr.bf16.mxu0 0
  %559 = vmatpush1.bf16.msra.mxu0 0
  %560 = vmatprep.subr.bf16.mxu0 0
  %561 = vmatpush1.bf16.msra.mxu0 0
  %562 = vmatprep.subr.bf16.mxu0 0
  %563 = vmatpush1.bf16.msra.mxu0 0
  %564 = vmatprep.subr.bf16.mxu0 0
  %565 = vmatpush1.bf16.msra.mxu0 0
  %566 = vmatprep.subr.bf16.mxu0 0
  %567 = vmatpush1.bf16.msra.mxu0 0
  %568 = vmatprep.subr.bf16.mxu0 0
  %569 = vmatpush1.bf16.msra.mxu0 0
  %570 = vmatprep.subr.bf16.mxu0 0
  %571 = vmatpush1.bf16.msra.mxu0 0
  %572 = vmatprep.subr.bf16.mxu0 0
  %573 = vmatpush1.bf16.msra.mxu0 0
  %574 = vmatprep.subr.bf16.mxu0 0
  %575 = vmatpush1.bf16.msra.mxu0 0
  %576 = vmatprep.mubr.bf16.mxu0 0
  %577 = vmatmul.mubr.bf16.gmra.mrb[0].mxu0 %v542
  %v578 = vpop.f32.mrb[0].mxu0
  %v579 = vadd.f32 0.0, %v578
  %v580 = vpop.f32.mrb[0].mxu0
  %v581 = vadd.f32 0.0, %v580
  %v582 = vpop.f32.mrb[0].mxu0
  %v583 = vadd.f32 0.0, %v582
  %v584 = vpop.f32.mrb[0].mxu0
  %v585 = vadd.f32 0.0, %v584
  %586 = vdwg.mxu0
  %587 = vmatprep.subr.bf16.mxu0 %v493
  %588 = vmatpush1.bf16.msra.mxu0 %v492
  %589 = vmatprep.subr.bf16.mxu0 %v495
  %590 = vmatpush1.bf16.msra.mxu0 %v494
  %591 = vmatprep.subr.bf16.mxu0 %v497
  %592 = vmatpush1.bf16.msra.mxu0 %v496
  %593 = vmatprep.subr.bf16.mxu0 %v499
  %594 = vmatpush1.bf16.msra.mxu0 %v498
  %595 = vmatprep.subr.bf16.mxu0 0
  %596 = vmatpush1.bf16.msra.mxu0 0
  %597 = vmatprep.subr.bf16.mxu0 0
  %598 = vmatpush1.bf16.msra.mxu0 0
  %599 = vmatprep.subr.bf16.mxu0 0
  %600 = vmatpush1.bf16.msra.mxu0 0
  %601 = vmatprep.subr.bf16.mxu0 0
  %602 = vmatpush1.bf16.msra.mxu0 0
  %603 = vmatprep.subr.bf16.mxu0 0
  %604 = vmatpush1.bf16.msra.mxu0 0
  %605 = vmatprep.subr.bf16.mxu0 0
  %606 = vmatpush1.bf16.msra.mxu0 0
  %607 = vmatprep.subr.bf16.mxu0 0
  %608 = vmatpush1.bf16.msra.mxu0 0
  %609 = vmatprep.subr.bf16.mxu0 0
  %610 = vmatpush1.bf16.msra.mxu0 0
  %611 = vmatprep.subr.bf16.mxu0 0
  %612 = vmatpush1.bf16.msra.mxu0 0
  %613 = vmatprep.subr.bf16.mxu0 0
  %614 = vmatpush1.bf16.msra.mxu0 0
  %615 = vmatprep.subr.bf16.mxu0 0
  %616 = vmatpush1.bf16.msra.mxu0 0
  %617 = vmatprep.subr.bf16.mxu0 0
  %618 = vmatpush1.bf16.msra.mxu0 0
  %619 = vmatprep.mubr.bf16.mxu0 0
  %620 = vmatmul.mubr.bf16.gmra.mrb[0].mxu0 %v542
  %v621 = vpop.f32.mrb[0].mxu0
  %v622 = vadd.f32 %v579, %v621
  %v623 = vpop.f32.mrb[0].mxu0
  %v624 = vadd.f32 %v581, %v623
  %v625 = vpop.f32.mrb[0].mxu0
  %v626 = vadd.f32 %v583, %v625
  %v627 = vpop.f32.mrb[0].mxu0
  %v628 = vadd.f32 %v585, %v627
  %629 = vdwg.mxu0
  %v631 = vsel %vm540, %v491, 0
  %633 = vmatprep.subr.bf16.mxu0 %v493
  %634 = vmatpush1.bf16.msra.mxu0 %v492
  %635 = vmatprep.subr.bf16.mxu0 %v495
  %636 = vmatpush1.bf16.msra.mxu0 %v494
  %637 = vmatprep.subr.bf16.mxu0 %v497
  %638 = vmatpush1.bf16.msra.mxu0 %v496
  %639 = vmatprep.subr.bf16.mxu0 %v499
  %640 = vmatpush1.bf16.msra.mxu0 %v498
  %641 = vmatprep.subr.bf16.mxu0 0
  %642 = vmatpush1.bf16.msra.mxu0 0
  %643 = vmatprep.subr.bf16.mxu0 0
  %644 = vmatpush1.bf16.msra.mxu0 0
  %645 = vmatprep.subr.bf16.mxu0 0
  %646 = vmatpush1.bf16.msra.mxu0 0
  %647 = vmatprep.subr.bf16.mxu0 0
  %648 = vmatpush1.bf16.msra.mxu0 0
  %649 = vmatprep.subr.bf16.mxu0 0
  %650 = vmatpush1.bf16.msra.mxu0 0
  %651 = vmatprep.subr.bf16.mxu0 0
  %652 = vmatpush1.bf16.msra.mxu0 0
  %653 = vmatprep.subr.bf16.mxu0 0
  %654 = vmatpush1.bf16.msra.mxu0 0
  %655 = vmatprep.subr.bf16.mxu0 0
  %656 = vmatpush1.bf16.msra.mxu0 0
  %657 = vmatprep.subr.bf16.mxu0 0
  %658 = vmatpush1.bf16.msra.mxu0 0
  %659 = vmatprep.subr.bf16.mxu0 0
  %660 = vmatpush1.bf16.msra.mxu0 0
  %661 = vmatprep.subr.bf16.mxu0 0
  %662 = vmatpush1.bf16.msra.mxu0 0
  %663 = vmatprep.subr.bf16.mxu0 0
  %664 = vmatpush1.bf16.msra.mxu0 0
  %665 = vmatprep.mubr.bf16.mxu0 0
  %666 = vmatmul.mubr.bf16.gmra.mrb[0].mxu0 %v631
  %v667 = vpop.f32.mrb[0].mxu0
  %v668 = vadd.f32 0.0, %v667
  %v669 = vpop.f32.mrb[0].mxu0
  %v670 = vadd.f32 0.0, %v669
  %v671 = vpop.f32.mrb[0].mxu0
  %v672 = vadd.f32 0.0, %v671
  %v673 = vpop.f32.mrb[0].mxu0
  %v674 = vadd.f32 0.0, %v673
  %675 = vdwg.mxu0
  %v676 = vadd.f32 %v622, %v668
  %v677 = vadd.f32 %v624, %v670
  %v678 = vadd.f32 %v626, %v672
  %v679 = vadd.f32 %v628, %v674
  %v680 = vld [vmem:[%s4] sm:$0xff]
  %v681 = vld [vmem:[%s4 + $0x8] sm:$0xff]
  %683 = vset.pattern.permute.xlu0 0
  %684 = vperm.xlu0 %683, %v680
  %v685 = vpop.permute.xlu0 %684
  %688 = vset.pattern.permute.xlu0 0
  %689 = vperm.xlu0 %688, %v681
  %v690 = vpop.permute.xlu0 %689
  %v692 = vadd.f32 %v676, %v685
  %v693 = vadd.f32 %v677, %v685
  %v694 = vadd.f32 %v678, %v690
  %v695 = vadd.f32 %v679, %v690
  %v696 = vsub.f32 0.0, %v692
  %v697 = vsub.f32 0.0, %v693
  %v698 = vsub.f32 0.0, %v694
  %v699 = vsub.f32 0.0, %v695
  %v700 = vmul.f32 %v696, 1.442695
  %v701 = vpow.pop %v700
  %v702 = vmul.f32 %v697, 1.442695
  %v703 = vpow.pop %v702
  %v704 = vmul.f32 %v698, 1.442695
  %v705 = vpow.pop %v704
  %v706 = vmul.f32 %v699, 1.442695
  %v707 = vpow.pop %v706
  %v708 = vadd.f32 %v701, 1.0
  %v709 = vadd.f32 %v703, 1.0
  %v710 = vadd.f32 %v705, 1.0
  %v711 = vadd.f32 %v707, 1.0
  %v712 = vrcp.pop %v708
  %v713 = vmul.f32 1.0, %v712
  %v714 = vrcp.pop %v709
  %v715 = vmul.f32 1.0, %v714
  %v716 = vrcp.pop %v710
  %v717 = vmul.f32 1.0, %v716
  %v718 = vrcp.pop %v711
  %v719 = vmul.f32 1.0, %v718
  %v720 = vmul.f32 %v692, %v713
  %v721 = vmul.f32 %v693, %v715
  %v722 = vmul.f32 %v694, %v717
  %v723 = vmul.f32 %v695, %v719
  %724 = vst [vmem:[%s5] sm:$0xff] %v720
  %725 = vst [vmem:[%s5 + $0x8] sm:$0xff] %v721
  %726 = vst [vmem:[%s5 + $0x10] sm:$0xff] %v722
  %727 = vst [vmem:[%s5 + $0x18] sm:$0xff] %v723
  // Predicated region
  $region22: #{model_forward.1} parent=0 // pred_check
    _
  $region23: #{model_forward.1} parent=0 // pred_check_branch
    %729 = sbr.rel (0) target = $region25
  $region24: #{model_forward.1} parent=0 // pred_region
    _
  $region25: #{model_forward.1} parent=0 // pred_fallthru
    _
  // Predicated region
  $region26: #{model_forward.1} parent=0 // pred_check
    _
  $region27: #{model_forward.1} parent=0 // pred_check_branch
    %731 = sbr.rel (0) target = $region29
  $region28: #{model_forward.1} parent=0 // pred_region
    _
  $region29: #{model_forward.1} parent=0 // pred_fallthru
    _

</llo_original>
